<compile_context>
chip_gen: v6e
topology: v6e:2x2x1
jax: 0.10.0
libtpu: 0.0.40
codegen_flags: <defaults>
</compile_context>

<pallas_src>
import functools
import math

import jax
import jax.numpy as jnp
import numpy as np
from jax.experimental import pallas as pl
from jax.experimental.pallas import tpu as pltpu

EPS = 1e-7
_HALF_LOG_2PI = 0.5 * math.log(2.0 * math.pi)
_VMEM_LIMIT_BYTES = 40 * 1024 * 1024        # > v5e/v6e/v7x default scoped, < v7x physical
_DEFAULT_TILE_BUDGET = 24 * 1024 * 1024     # double-buffered streamed-operand budget
_MAX_ROWS = 256


def _cdiv(a, b):
    return (a + b - 1) // b


def _ceil_to(n, m):
    return ((n + m - 1) // m) * m


def _choose_rows(batch, max_rows=_MAX_ROWS):
    """Row-block size: multiple of 8 (or == B for tiny B), aiming for >=2 row blocks."""
    if batch <= 8:
        return batch                                  # single block == full dim (legal)
    return min(max_rows, _ceil_to((batch + 1) // 2, 8))


def _choose_lane_tile(lanes, lane_unit, brows, bytes_per_lane_row,
                      max_lane_tile, vmem_budget_bytes):
    """Largest lane tile (multiple of lane_unit, <= lanes) fitting the VMEM budget."""
    if lanes <= lane_unit:
        return lanes                                  # single block == full dim (legal)
    per_unit = 2 * brows * lane_unit * bytes_per_lane_row   # double-buffered bytes
    budget_units = max(1, int(vmem_budget_bytes // max(per_unit, 1)))
    cap_units = max(1, int(max_lane_tile // lane_unit))
    fit_units = max(1, lanes // lane_unit)            # keep tile <= array extent
    return min(budget_units, cap_units, fit_units) * lane_unit


def _entity_masked_kernel(*refs, loss_type, lanes, lane_tile, mask_lanes, mask_tile):
    """One (B-tile, lane-tile) grid step: accumulate per-row masked-loss and mask count."""
    numer_ref, denom_ref = refs[-2], refs[-1]
    j = pl.program_id(1)

    @pl.when(j == 0)
    def _init():
        numer_ref[...] = jnp.zeros_like(numer_ref)
        denom_ref[...] = jnp.zeros_like(denom_ref)

    def _valid(tile_w, total):
        # Static no-op when the lane tiling is exact; otherwise a valid-lane predicate
        # for the ragged last block (its DMA padding is unspecified, so SELECT it away).
        if total % tile_w == 0:
            return None
        idx = jax.lax.broadcasted_iota(jnp.int32, (1, tile_w), 1)
        return (j * tile_w + idx) < total

    if loss_type == "quantile":
        x_ref, t_ref, q_ref, qm1_ref, mask_ref = refs[:5]
        x = x_ref[...].astype(jnp.float32)            # (brows, tL), Q-interleaved lanes
        err = t_ref[...].astype(jnp.float32) - x
        ell = jnp.maximum(qm1_ref[...] * err, q_ref[...] * err)   # pinball loss / lane
        v = _valid(lane_tile, lanes)
        if v is not None:
            ell = jnp.where(v, ell, 0.0)
        # QuantileLoss(reduction='none') is already summed over M and Q (shape (B,1)),
        # so the entity mask only enters through the per-row mask count (denominator).
        numer_ref[...] += jnp.sum(ell, axis=-1, keepdims=True)
        mask = mask_ref[...].astype(jnp.float32)
    elif loss_type == "gaussian_loglik":
        mu_ref, ls_ref, t_ref, mask_ref = refs[:4]
        mu = mu_ref[...].astype(jnp.float32)
        ls = ls_ref[...].astype(jnp.float32)
        d = t_ref[...].astype(jnp.float32) - mu
        ell = 0.5 * d * d * jnp.exp(-2.0 * ls) + ls + _HALF_LOG_2PI
        mask = mask_ref[...].astype(jnp.float32)
        masked = ell * mask
        v = _valid(lane_tile, lanes)
        if v is not None:
            masked = jnp.where(v, masked, 0.0)
        numer_ref[...] += jnp.sum(masked, axis=-1, keepdims=True)
    elif loss_type == "mse":
        x_ref, t_ref, mask_ref = refs[:3]
        d = x_ref[...].astype(jnp.float32) - t_ref[...].astype(jnp.float32)
        mask = mask_ref[...].astype(jnp.float32)
        masked = d * d * mask
        v = _valid(lane_tile, lanes)
        if v is not None:
            masked = jnp.where(v, masked, 0.0)
        numer_ref[...] += jnp.sum(masked, axis=-1, keepdims=True)
    else:
        raise ValueError(f"Unknown loss_type: {loss_type}")

    mv = _valid(mask_tile, mask_lanes)
    if mv is not None:
        mask = jnp.where(mv, mask, 0.0)
    # TODO(synk): accumulate lane-locally into a (brows, 128) scratch and reduce only at
    # the last lane step once the inner-loop XLU reduce shows up as a bottleneck.
    denom_ref[...] += jnp.sum(mask, axis=-1, keepdims=True)


def entity_masked_loss(inp, target, mask, sample_weight=None, *,
                       loss_type="mse", quantiles=None,
                       max_lane_tile=16384, vmem_budget_bytes=_DEFAULT_TILE_BUDGET):
    """Pallas-backed EntityMaskedLoss.forward (inner loss selected by `loss_type`)."""
    assert inp.ndim == 3, "Input should be a BMC tensor."
    assert mask.ndim == 2, "Mask should be a BM tensor."
    B, M, C = inp.shape
    assert mask.shape == (B, M)
    if mask.dtype == jnp.bool_:
        mask = mask.astype(jnp.int8)                  # stream narrow; upcast in-register
    t2d = target[..., 0] if target.ndim == 3 else target        # (B, M)
    assert t2d.shape == (B, M)

    brows = _choose_rows(B)

    if loss_type == "quantile":
        assert quantiles is not None and len(quantiles) == C
        Q = C
        lanes = M * Q
        lane_unit = 128 * Q        # keeps both the x tile and the mask tile 128-aligned
        bpl = inp.dtype.itemsize + t2d.dtype.itemsize + mask.dtype.itemsize / Q
        tL = _choose_lane_tile(lanes, lane_unit, brows, bpl, max_lane_tile,
                               vmem_budget_bytes)
        tM = tL // Q
        x = inp.reshape(B, lanes)                     # free lane-dense reshape, native dtype
        # TODO(synk): expand the (brows, tM) target tile on-chip (interleaved lane repeat)
        # instead of materializing a full B*M*Q copy here.
        t_rep = jnp.repeat(t2d, Q, axis=-1)           # (B, M*Q)
        q_row = jnp.asarray(np.tile(np.asarray(quantiles, dtype=np.float32),
                                    tL // Q))[None, :]           # (1, tL)
        qm1_row = q_row - 1.0                                     # resident (q - 1) row
        operands = (x, t_rep, q_row, qm1_row, mask)
        in_specs = [
            pl.BlockSpec((brows, tL), lambda i, j: (i, j)),
            pl.BlockSpec((brows, tL), lambda i, j: (i, j)),
            pl.BlockSpec((1, tL), lambda i, j: (0, 0)),           # resident quantile row
            pl.BlockSpec((1, tL), lambda i, j: (0, 0)),           # resident (q-1) row
            pl.BlockSpec((brows, tM), lambda i, j: (i, j)),
        ]
        mask_tile, mask_lanes = tM, M
        flops, trans = 6 * B * lanes, 0
    elif loss_type == "gaussian_loglik":
        assert C == 2, "GaussianLogLikLoss expects input[...,0]=mean, input[...,1]=log-std."
        lanes = M
        bpl = 2 * inp.dtype.itemsize + t2d.dtype.itemsize + mask.dtype.itemsize
        tL = _choose_lane_tile(lanes, 128, brows, bpl, max_lane_tile, vmem_budget_bytes)
        # TODO(synk): fuse this mean/log-std de-interleave on-chip (even/odd lane split of
        # a free (B, 2M) view) to remove one extra XLA pass over `inp`.
        mu = inp[..., 0]
        ls = inp[..., 1]
        operands = (mu, ls, t2d, mask)
        in_specs = [pl.BlockSpec((brows, tL), lambda i, j: (i, j))] * 4
        mask_tile, mask_lanes = tL, M
        flops, trans = 8 * B * M, B * M
    elif loss_type == "mse":
        lanes = M
        bpl = inp.dtype.itemsize + t2d.dtype.itemsize + mask.dtype.itemsize
        tL = _choose_lane_tile(lanes, 128, brows, bpl, max_lane_tile, vmem_budget_bytes)
        x = inp[..., 0]            # channel 0, matching `loss_elements[..., 0]` (free for C==1)
        operands = (x, t2d, mask)
        in_specs = [pl.BlockSpec((brows, tL), lambda i, j: (i, j))] * 3
        mask_tile, mask_lanes = tL, M
        flops, trans = 3 * B * M, 0
    else:
        raise ValueError(f"Unknown loss_type: {loss_type}")

    grid = (_cdiv(B, brows), _cdiv(lanes, tL))
    bytes_accessed = int(sum(int(np.prod(o.shape)) * o.dtype.itemsize for o in operands)
                         + 2 * B * 4)
    kernel = functools.partial(_entity_masked_kernel, loss_type=loss_type,
                               lanes=lanes, lane_tile=tL,
                               mask_lanes=mask_lanes, mask_tile=mask_tile)

    numer, denom = pl.pallas_call(
        kernel,
        out_shape=(jax.ShapeDtypeStruct((B, 1), jnp.float32),
                   jax.ShapeDtypeStruct((B, 1), jnp.float32)),
        grid=grid,
        in_specs=in_specs,
        out_specs=(pl.BlockSpec((brows, 1), lambda i, j: (i, 0)),   # accumulators over j
                   pl.BlockSpec((brows, 1), lambda i, j: (i, 0))),
        compiler_params=pltpu.CompilerParams(
            dimension_semantics=("parallel", "arbitrary"),
            vmem_limit_bytes=_VMEM_LIMIT_BYTES),
        cost_estimate=pl.CostEstimate(flops=int(flops), transcendentals=int(trans),
                                      bytes_accessed=bytes_accessed),
    )(*operands)

    numer = numer[:, 0]
    denom = denom[:, 0]
    if loss_type == "quantile":
        per_sample = (numer * denom) / (denom + EPS)   # (B,1) unreduced loss * mask, reduced
    else:
        per_sample = numer / (denom + EPS)

    # EntityMaskedLoss.reduce_samples
    if sample_weight is None:
        return per_sample.mean()
    sample_weight = sample_weight.reshape(B).astype(per_sample.dtype)
    return (per_sample * sample_weight).mean()


class EntityMaskedLossPallas:
    """Mirrors EntityMaskedLoss(loss_cls): call with (input, target, mask, sample_weight)."""

    def __init__(self, loss_type, quantiles=None):
        self.loss_type = loss_type
        self.quantiles = quantiles

    def __call__(self, inp, target, mask, sample_weight=None):
        return entity_masked_loss(inp, target, mask, sample_weight,
                                  loss_type=self.loss_type, quantiles=self.quantiles)


def _reference_entity_masked_loss(inp, target, mask, sample_weight, loss_type, quantiles):
    """Pure-JAX transcription of the PyTorch EntityMaskedLoss.forward, for verification."""
    m = mask.astype(jnp.float32)
    t = (target[..., 0] if target.ndim == 3 else target).astype(jnp.float32)
    x = inp.astype(jnp.float32)
    if loss_type == "mse":
        ell = (x[..., 0] - t) ** 2                                 # loss_elements[..., 0]
        per = (ell * m).sum(-1) / (m.sum(-1) + EPS)
    elif loss_type == "gaussian_loglik":
        mu, ls = x[..., 0], x[..., 1]
        ell = 0.5 * ((t - mu) * jnp.exp(-ls)) ** 2 + ls + _HALF_LOG_2PI
        per = (ell * m).sum(-1) / (m.sum(-1) + EPS)
    elif loss_type == "quantile":
        total = jnp.zeros(x.shape[0], jnp.float32)
        for i, q in enumerate(quantiles):
            e = t - x[:, :, i]
            total = total + jnp.maximum((q - 1.0) * e, q * e).sum(-1)
        # QuantileLoss(reduction='none') is (B, 1); broadcasting against the (B, M) mask:
        per = (total * m.sum(-1)) / (m.sum(-1) + EPS)
    else:
        raise ValueError(loss_type)
    if sample_weight is None:
        return per.mean()
    w = sample_weight.reshape(per.shape[0]).astype(per.dtype)
    return (per * w).mean()


if __name__ == "__main__":
    key = jax.random.PRNGKey(0)
    ks = jax.random.split(key, 12)
    checks = []

    # --- EntityMaskedLoss(nn.MSELoss): input (B, M, 1) -----------------------------
    B, M = 4, 300
    x = jax.random.normal(ks[0], (B, M, 1), jnp.float32)
    t = jax.random.normal(ks[1], (B, M, 1), jnp.float32)
    mask = (jax.random.uniform(ks[2], (B, M)) < 0.7).astype(jnp.float32)
    checks.append(("mse",
                   entity_masked_loss(x, t, mask, loss_type="mse"),
                   _reference_entity_masked_loss(x, t, mask, None, "mse", None)))

    # bool mask streams natively (shipped as int8, upcast in-register)
    mask_bool = jax.random.uniform(ks[2], (B, M)) < 0.7
    checks.append(("mse_bool_mask",
                   entity_masked_loss(x, t, mask_bool, loss_type="mse"),
                   _reference_entity_masked_loss(x, t, mask_bool.astype(jnp.float32),
                                                 None, "mse", None)))

    # --- EntityMaskedLoss(GaussianLogLikLoss): input (B, M, 2), target (B, M) ------
    xg = jax.random.normal(ks[3], (B, M, 2), jnp.float32) * 0.5
    tg = jax.random.normal(ks[4], (B, M), jnp.float32)
    gauss_loss = EntityMaskedLossPallas("gaussian_loglik")
    checks.append(("gaussian",
                   gauss_loss(xg, tg, mask),
                   _reference_entity_masked_loss(xg, tg, mask, None, "gaussian_loglik", None)))

    # with per-sample weights
    sw = jax.random.uniform(ks[5], (B,), jnp.float32)
    checks.append(("gaussian_weighted",
                   gauss_loss(xg, tg, mask, sample_weight=sw),
                   _reference_entity_masked_loss(xg, tg, mask, sw, "gaussian_loglik", None)))

    # --- EntityMaskedLoss(QuantileLoss): input (B, M, Q), target (B, M, 1) ---------
    quantiles = (0.1, 0.5, 0.9)
    xq = jax.random.normal(ks[6], (B, M, 3), jnp.float32)
    tq = jax.random.normal(ks[7], (B, M, 1), jnp.float32)
    checks.append(("quantile",
                   entity_masked_loss(xq, tq, mask, loss_type="quantile", quantiles=quantiles),
                   _reference_entity_masked_loss(xq, tq, mask, None, "quantile", quantiles)))

    # --- bf16 inputs stream natively ------------------------------------------------
    xb, tb = x.astype(jnp.bfloat16), t.astype(jnp.bfloat16)
    checks.append(("mse_bf16",
                   entity_masked_loss(xb, tb, mask, loss_type="mse"),
                   _reference_entity_masked_loss(xb.astype(jnp.float32),
                                                 tb.astype(jnp.float32),
                                                 mask, None, "mse", None)))

    # --- ragged shapes + small lane tiles: exercises in-kernel ragged-tail masking,
    #     partial row blocks, and multi-step accumulation along the "arbitrary" axis ----
    B2, M2 = 10, 520
    x2 = jax.random.normal(ks[8], (B2, M2, 3), jnp.float32)
    t2 = jax.random.normal(ks[9], (B2, M2), jnp.float32)
    m2 = (jax.random.uniform(ks[10], (B2, M2)) < 0.5).astype(jnp.float32)
    checks.append(("quantile_tiled",
                   entity_masked_loss(x2, t2, m2, loss_type="quantile",
                                      quantiles=quantiles, max_lane_tile=384),
                   _reference_entity_masked_loss(x2, t2, m2, None, "quantile", quantiles)))
    checks.append(("gaussian_tiled",
                   entity_masked_loss(x2[..., :2], t2, m2, loss_type="gaussian_loglik",
                                      max_lane_tile=256),
                   _reference_entity_masked_loss(x2[..., :2], t2, m2, None,
                                                 "gaussian_loglik", None)))

    for name, got, want in checks:
        got = jax.block_until_ready(got)
        assert jnp.allclose(got, want, rtol=2e-4, atol=2e-4), (name, float(got), float(want))

    print("KERNEL_OK")
</pallas_src>

<mosaic_0001>
module attributes {stable_mosaic.version = 11 : i64} {
  func.func @_entity_masked_kernel(%arg0: i32, %arg1: i32, %arg2: memref<4x256xf32, #tpu.memory_space<vmem>>, %arg3: memref<4x256xf32, #tpu.memory_space<vmem>>, %arg4: memref<4x256xf32, #tpu.memory_space<vmem>>, %arg5: memref<4x1xf32, #tpu.memory_space<vmem>>, %arg6: memref<4x1xf32, #tpu.memory_space<vmem>>) attributes {dimension_semantics = [#tpu.dimension_semantics<parallel>, #tpu.dimension_semantics<arbitrary>], iteration_bounds = array<i64: 1, 2>, scalar_prefetch = 0 : i64, scratch_operands = 0 : i64, tpu.core_type = #tpu.core_type<tc>, window_params = [{transform_indices = @transform_0, window_bounds = array<i64: 4, 256>}, {transform_indices = @transform_1, window_bounds = array<i64: 4, 256>}, {transform_indices = @transform_2, window_bounds = array<i64: 4, 256>}, {transform_indices = @transform_3, window_bounds = array<i64: 4, 1>}, {transform_indices = @transform_4, window_bounds = array<i64: 4, 1>}]} {
    %c0_i32 = arith.constant 0 : i32
    %0 = arith.cmpi eq, %arg1, %c0_i32 : i32
    %1 = arith.extui %0 : i1 to i32
    %c0_i32_0 = arith.constant 0 : i32
    %2 = arith.cmpi ne, %1, %c0_i32_0 : i32
    scf.if %2 {
      %cst_19 = arith.constant 0.000000e+00 : f32
      %39 = vector.broadcast %cst_19 : f32 to vector<4x1xf32>
      %c0_20 = arith.constant 0 : index
      %c0_21 = arith.constant 0 : index
      %40 = vector.load %arg5[%c0_20, %c0_21] : memref<4x1xf32, #tpu.memory_space<vmem>>, vector<4x1xf32>
      tpu.vector_store %arg5[%c0_20, %c0_21], %39 {strides = array<i32>} : memref<4x1xf32, #tpu.memory_space<vmem>>, vector<4x1xf32>,
      %cst_22 = arith.constant 0.000000e+00 : f32
      %41 = vector.broadcast %cst_22 : f32 to vector<4x1xf32>
      %c0_23 = arith.constant 0 : index
      %c0_24 = arith.constant 0 : index
      %42 = vector.load %arg6[%c0_23, %c0_24] : memref<4x1xf32, #tpu.memory_space<vmem>>, vector<4x1xf32>
      tpu.vector_store %arg6[%c0_23, %c0_24], %41 {strides = array<i32>} : memref<4x1xf32, #tpu.memory_space<vmem>>, vector<4x1xf32>,
    } else {
    }
    %c0 = arith.constant 0 : index
    %c0_1 = arith.constant 0 : index
    %3 = vector.load %arg2[%c0, %c0_1] : memref<4x256xf32, #tpu.memory_space<vmem>>, vector<4x256xf32>
    %c0_2 = arith.constant 0 : index
    %c0_3 = arith.constant 0 : index
    %4 = vector.load %arg3[%c0_2, %c0_3] : memref<4x256xf32, #tpu.memory_space<vmem>>, vector<4x256xf32>
    %5 = arith.subf %3, %4 : vector<4x256xf32>
    %c0_4 = arith.constant 0 : index
    %c0_5 = arith.constant 0 : index
    %6 = vector.load %arg4[%c0_4, %c0_5] : memref<4x256xf32, #tpu.memory_space<vmem>>, vector<4x256xf32>
    %7 = arith.mulf %5, %5 : vector<4x256xf32>
    %8 = arith.mulf %7, %6 : vector<4x256xf32>
    %9 = tpu.iota {dimensions = array<i32: 1>} : vector<1x256xi32>
    %c256_i32 = arith.constant 256 : i32
    %10 = arith.muli %arg1, %c256_i32 : i32
    %11 = vector.broadcast %10 : i32 to vector<1x256xi32>
    %12 = arith.addi %11, %9 : vector<1x256xi32>
    %c300_i32 = arith.constant 300 : i32
    %13 = vector.broadcast %c300_i32 : i32 to vector<1x256xi32>
    %14 = arith.cmpi slt, %12, %13 : vector<1x256xi32>
    %cst = arith.constant 0.000000e+00 : f32
    %15 = vector.shape_cast %14 : vector<1x256xi1> to vector<1x256xi1>
    %16 = vector.broadcast %15 : vector<1x256xi1> to vector<4x256xi1>
    %17 = vector.broadcast %cst : f32 to vector<4x256xf32>
    %18 = arith.select %16, %8, %17 : vector<4x256xi1>, vector<4x256xf32>
    %c0_6 = arith.constant 0 : index
    %c0_7 = arith.constant 0 : index
    %19 = vector.load %arg5[%c0_6, %c0_7] : memref<4x1xf32, #tpu.memory_space<vmem>>, vector<4x1xf32>
    %cst_8 = arith.constant dense<0.000000e+00> : vector<4xf32>
    %20 = vector.multi_reduction <add>, %18, %cst_8 [1] : vector<4x256xf32> to vector<4xf32>
    %21 = vector.shape_cast %20 : vector<4xf32> to vector<4x1xf32>
    %22 = arith.addf %19, %21 : vector<4x1xf32>
    %c0_9 = arith.constant 0 : index
    %c0_10 = arith.constant 0 : index
    %23 = vector.load %arg5[%c0_9, %c0_10] : memref<4x1xf32, #tpu.memory_space<vmem>>, vector<4x1xf32>
    tpu.vector_store %arg5[%c0_9, %c0_10], %22 {strides = array<i32>} : memref<4x1xf32, #tpu.memory_space<vmem>>, vector<4x1xf32>,
    %24 = tpu.iota {dimensions = array<i32: 1>} : vector<1x256xi32>
    %c256_i32_11 = arith.constant 256 : i32
    %25 = arith.muli %arg1, %c256_i32_11 : i32
    %26 = vector.broadcast %25 : i32 to vector<1x256xi32>
    %27 = arith.addi %26, %24 : vector<1x256xi32>
    %c300_i32_12 = arith.constant 300 : i32
    %28 = vector.broadcast %c300_i32_12 : i32 to vector<1x256xi32>
    %29 = arith.cmpi slt, %27, %28 : vector<1x256xi32>
    %cst_13 = arith.constant 0.000000e+00 : f32
    %30 = vector.shape_cast %29 : vector<1x256xi1> to vector<1x256xi1>
    %31 = vector.broadcast %30 : vector<1x256xi1> to vector<4x256xi1>
    %32 = vector.broadcast %cst_13 : f32 to vector<4x256xf32>
    %33 = arith.select %31, %6, %32 : vector<4x256xi1>, vector<4x256xf32>
    %c0_14 = arith.constant 0 : index
    %c0_15 = arith.constant 0 : index
    %34 = vector.load %arg6[%c0_14, %c0_15] : memref<4x1xf32, #tpu.memory_space<vmem>>, vector<4x1xf32>
    %cst_16 = arith.constant dense<0.000000e+00> : vector<4xf32>
    %35 = vector.multi_reduction <add>, %33, %cst_16 [1] : vector<4x256xf32> to vector<4xf32>
    %36 = vector.shape_cast %35 : vector<4xf32> to vector<4x1xf32>
    %37 = arith.addf %34, %36 : vector<4x1xf32>
    %c0_17 = arith.constant 0 : index
    %c0_18 = arith.constant 0 : index
    %38 = vector.load %arg6[%c0_17, %c0_18] : memref<4x1xf32, #tpu.memory_space<vmem>>, vector<4x1xf32>
    tpu.vector_store %arg6[%c0_17, %c0_18], %37 {strides = array<i32>} : memref<4x1xf32, #tpu.memory_space<vmem>>, vector<4x1xf32>,
    return
  }
  func.func @transform_0(%arg0: i32, %arg1: i32) -> (i32, i32) {
    %c0_i32 = arith.constant 0 : i32
    return %arg0, %arg1 : i32, i32
  }
  func.func @transform_1(%arg0: i32, %arg1: i32) -> (i32, i32) {
    %c0_i32 = arith.constant 0 : i32
    return %arg0, %arg1 : i32, i32
  }
  func.func @transform_2(%arg0: i32, %arg1: i32) -> (i32, i32) {
    %c0_i32 = arith.constant 0 : i32
    return %arg0, %arg1 : i32, i32
  }
  func.func @transform_3(%arg0: i32, %arg1: i32) -> (i32, i32) {
    %c0_i32 = arith.constant 0 : i32
    %c0_i32_0 = arith.constant 0 : i32
    return %arg0, %c0_i32 : i32, i32
  }
  func.func @transform_4(%arg0: i32, %arg1: i32) -> (i32, i32) {
    %c0_i32 = arith.constant 0 : i32
    %c0_i32_0 = arith.constant 0 : i32
    return %arg0, %c0_i32 : i32, i32
  }
}

</mosaic_0001>

<llo_original>
// kernel: tpu_custom_call.1
$region0: #{tpu_custom_call.1}
  #allocation0 [shape = 'u32[]', space=smem, size = 0x4, offset = 0x4, fixed_abs, tag = 'smem constant byte address 0x4 - core index']
  #allocation1 [shape = 'u32[144,128]{1,0:T(1,128)}', space=vmem, size = 0x12000, scoped, tag = 'internal scratch']
  %s0 = inlined_call_operand.hbm [shape: f32[4,300], index: 0, kind: input, shape index: {}]
  %s1 = inlined_call_operand.hbm [shape: f32[4,300], index: 1, kind: input, shape index: {}]
  %s2 = inlined_call_operand.hbm [shape: f32[4,300], index: 2, kind: input, shape index: {}]
  %s3 = inlined_call_operand.vmem [shape: f32[4,1], index: 3, kind: output, shape index: {0}]
  %s4 = inlined_call_operand.vmem [shape: f32[4,1], index: 4, kind: output, shape index: {1}]
  %5 = xla_tuple %s3, %s4
  %s6 = sld [smem:[#allocation0]]
  $region69: #{tpu_custom_call.1} parent=0
    _
  %s8 = ssub.s32 1, %s6
  %s9 = scalar_select 0, %s8, %s6
  $region1: #{tpu_custom_call.1} parent=0
    #allocation2 [shape = 'u8[8192]{0}', space=vmem, size = 0x2000, scoped, tag = 'input window, operand 0']
    #allocation3 [shape = 's32[2]{0}', space=sflag, size = 0x8, scoped, tag = 'scoped memory for tpu_custom_call.1']
    #allocation4 [shape = 'u8[8192]{0}', space=vmem, size = 0x2000, scoped, tag = 'input window, operand 1']
    #allocation5 [shape = 's32[2]{0}', space=sflag, size = 0x8, scoped, tag = 'scoped memory for tpu_custom_call.1']
    #allocation6 [shape = 'u8[8192]{0}', space=vmem, size = 0x2000, scoped, tag = 'input window, operand 2']
    %10 = vsyncpa [#allocation3], 0
    %s11 = scalar_lea.sflag [#allocation3], 1
    %12 = vsyncpa %s11, 0
    %13 = vsyncpa [#allocation5], 0
    %s14 = scalar_lea.sflag [#allocation5], 1
    %15 = vsyncpa %s14, 0
    loop: start=0, step=1, limit=4
    $region2: #{tpu_custom_call.1} parent=1 // loop_pre_header
      _
    $region3: #{tpu_custom_call.1} parent=1 // loop_header
      %s17 = sphi 0, %s21
      %p18 = scmp.ge.s32.totalorder %s17, 4
      %s24 = sphi 0, %s36
      %s25 = sphi 0, %s32
      %s26 = sphi 0, %s24
      %s27 = sphi 0, %s25
      %s28 = sphi 0, %s26
      %s29 = sphi 0, %s27
      %s41 = sphi 0, %s43
      %s44 = sphi 0, %s41
      %s45 = sphi 0, %s44
      %s61 = sphi 0, %s45
      %s69 = sphi 0, %s71
      %s72 = sphi 0, %s69
      %s73 = sphi 0, %s72
      %s89 = sphi 0, %s73
      %s97 = sphi 0, %s99
      %s100 = sphi 0, %s97
      %s101 = sphi 0, %s100
      %s117 = sphi 0, %s101
      %s123 = sphi 0, %s125
      %s126 = sphi 0, %s123
      %s127 = sphi 0, %s126
      %s143 = sphi 0, %s127
      %s149 = sphi 0, %s151
      %s152 = sphi 0, %s149
      %s153 = sphi 0, %s152
      %s169 = sphi 0, %s153
    $region4: #{tpu_custom_call.1} parent=1 // loop_header_branch
      %20 = sbr.rel (%p18) target = $region8
    $region5: #{tpu_custom_call.1} parent=1 // loop_body
      %s22 = ssub.s32 %s17, 1
      %s23 = ssub.s32 %s17, 2
      %s30 = sadd.s32 1, %s25
      %p31 = scmp.ge.s32.totalorder %s30, 2
      %s32 = scalar_select %p31, 0, %s30
      %s33 = sadd.s32 1, %s24
      %s34 = scalar_select %p31, %s33, %s24
      %p35 = scmp.ge.s32.totalorder %s34, 1
      %s36 = scalar_select %p35, 0, %s34
      %s37 = ssub.s32 %s24, %s36
      %s38 = ssub.s32 %s25, %s32
      %s39 = sor.u32 %s37, %s38
      %p40 = scmp.eq.s32.totalorder %s39, 0
      %s42 = sadd.s32 %s41, 1
      %s43 = scalar_select %p40, %s41, %s42
      %p46 = pneg %p40
      %p47 = scmp.eq.s32.totalorder %s17, 1
      %p48 = por %p46, %p47
      %p49 = scmp.ne.s32.totalorder %s41, %s44
      %p50 = scmp.eq.s32.totalorder %s17, 0
      %p51 = por %p49, %p50
      %p52 = scmp.ne.s32.totalorder %s41, %s44
      %p53 = scmp.eq.s32.totalorder %s22, 1
      %p54 = por %p52, %p53
      %p55 = scmp.ne.s32.totalorder %s44, %s45
      %p56 = scmp.eq.s32.totalorder %s22, 0
      %p57 = por %p55, %p56
      %p58 = scmp.ne.s32.totalorder %s44, %s45
      %p59 = scmp.eq.s32.totalorder %s23, 1
      %p60 = por %p58, %p59
      %p62 = scmp.ne.s32.totalorder %s45, %s61
      %p63 = scmp.eq.s32.totalorder %s23, 0
      %p64 = por %p62, %p63
      %s65 = ssub.s32 %s24, %s36
      %s66 = ssub.s32 %s25, %s32
      %s67 = sor.u32 %s65, %s66
      %p68 = scmp.eq.s32.totalorder %s67, 0
      %s70 = sadd.s32 %s69, 1
      %s71 = scalar_select %p68, %s69, %s70
      %p74 = pneg %p68
      %p75 = scmp.eq.s32.totalorder %s17, 1
      %p76 = por %p74, %p75
      %p77 = scmp.ne.s32.totalorder %s69, %s72
      %p78 = scmp.eq.s32.totalorder %s17, 0
      %p79 = por %p77, %p78
      %p80 = scmp.ne.s32.totalorder %s69, %s72
      %p81 = scmp.eq.s32.totalorder %s22, 1
      %p82 = por %p80, %p81
      %p83 = scmp.ne.s32.totalorder %s72, %s73
      %p84 = scmp.eq.s32.totalorder %s22, 0
      %p85 = por %p83, %p84
      %p86 = scmp.ne.s32.totalorder %s72, %s73
      %p87 = scmp.eq.s32.totalorder %s23, 1
      %p88 = por %p86, %p87
      %p90 = scmp.ne.s32.totalorder %s73, %s89
      %p91 = scmp.eq.s32.totalorder %s23, 0
      %p92 = por %p90, %p91
      %s93 = ssub.s32 %s24, %s36
      %s94 = ssub.s32 %s25, %s32
      %s95 = sor.u32 %s93, %s94
      %p96 = scmp.eq.s32.totalorder %s95, 0
      %s98 = sadd.s32 %s97, 1
      %s99 = scalar_select %p96, %s97, %s98
      %p102 = pneg %p96
      %p103 = scmp.eq.s32.totalorder %s17, 1
      %p104 = por %p102, %p103
      %p105 = scmp.ne.s32.totalorder %s97, %s100
      %p106 = scmp.eq.s32.totalorder %s17, 0
      %p107 = por %p105, %p106
      %p108 = scmp.ne.s32.totalorder %s97, %s100
      %p109 = scmp.eq.s32.totalorder %s22, 1
      %p110 = por %p108, %p109
      %p111 = scmp.ne.s32.totalorder %s100, %s101
      %p112 = scmp.eq.s32.totalorder %s22, 0
      %p113 = por %p111, %p112
      %p114 = scmp.ne.s32.totalorder %s100, %s101
      %p115 = scmp.eq.s32.totalorder %s23, 1
      %p116 = por %p114, %p115
      %p118 = scmp.ne.s32.totalorder %s101, %s117
      %p119 = scmp.eq.s32.totalorder %s23, 0
      %p120 = por %p118, %p119
      %s121 = ssub.s32 %s24, %s36
      %p122 = scmp.eq.s32.totalorder %s121, 0
      %s124 = sadd.s32 %s123, 1
      %s125 = scalar_select %p122, %s123, %s124
      %p128 = pneg %p122
      %p129 = scmp.eq.s32.totalorder %s17, 1
      %p130 = por %p128, %p129
      %p131 = scmp.ne.s32.totalorder %s123, %s126
      %p132 = scmp.eq.s32.totalorder %s17, 0
      %p133 = por %p131, %p132
      %p134 = scmp.ne.s32.totalorder %s123, %s126
      %p135 = scmp.eq.s32.totalorder %s22, 1
      %p136 = por %p134, %p135
      %p137 = scmp.ne.s32.totalorder %s126, %s127
      %p138 = scmp.eq.s32.totalorder %s22, 0
      %p139 = por %p137, %p138
      %p140 = scmp.ne.s32.totalorder %s126, %s127
      %p141 = scmp.eq.s32.totalorder %s23, 1
      %p142 = por %p140, %p141
      %p144 = scmp.ne.s32.totalorder %s127, %s143
      %p145 = scmp.eq.s32.totalorder %s23, 0
      %p146 = por %p144, %p145
      %s147 = ssub.s32 %s24, %s36
      %p148 = scmp.eq.s32.totalorder %s147, 0
      %s150 = sadd.s32 %s149, 1
      %s151 = scalar_select %p148, %s149, %s150
      %p154 = pneg %p148
      %p155 = scmp.eq.s32.totalorder %s17, 1
      %p156 = por %p154, %p155
      %p157 = scmp.ne.s32.totalorder %s149, %s152
      %p158 = scmp.eq.s32.totalorder %s17, 0
      %p159 = por %p157, %p158
      %p160 = scmp.ne.s32.totalorder %s149, %s152
      %p161 = scmp.eq.s32.totalorder %s22, 1
      %p162 = por %p160, %p161
      %p163 = scmp.ne.s32.totalorder %s152, %s153
      %p164 = scmp.eq.s32.totalorder %s22, 0
      %p165 = por %p163, %p164
      %p166 = scmp.ne.s32.totalorder %s152, %s153
      %p167 = scmp.eq.s32.totalorder %s23, 1
      %p168 = por %p166, %p167
      %p170 = scmp.ne.s32.totalorder %s153, %s169
      %p171 = scmp.eq.s32.totalorder %s23, 0
      %p172 = por %p170, %p171
      %p173 = scmp.le.s32.totalorder 1, %s17
      %p174 = scmp.lt.s32.totalorder %s17, 3
      %p175 = pnand %p173, %p174
      %p176 = pneg %p175
      // Predicated region
      $region9: #{tpu_custom_call.1} parent=5 // pred_check
        _
      $region10: #{tpu_custom_call.1} parent=5 // pred_check_branch
        %178 = sbr.rel (%p175) target = $region12
      $region11: #{tpu_custom_call.1} parent=5 // pred_region
        %s179 = ssub.s32 %s17, 1
      $region12: #{tpu_custom_call.1} parent=5 // pred_fallthru
        _
      %p180 = scmp.lt.s32.totalorder %s17, 2
      // Predicated region
      $region13: #{tpu_custom_call.1} parent=5 // pred_check
        %p181 = pneg %p180
      $region14: #{tpu_custom_call.1} parent=5 // pred_check_branch
        %183 = sbr.rel (%p181) target = $region16
      $region15: #{tpu_custom_call.1} parent=5 // pred_region
        // Predicated region
        $region17: #{tpu_custom_call.1} parent=15 // pred_check
          %p184 = pneg %p51
        $region18: #{tpu_custom_call.1} parent=15 // pred_check_branch
          %186 = sbr.rel (%p184) target = $region20
        $region19: #{tpu_custom_call.1} parent=15 // pred_region
          %s187 = sand.u32 %s41, 1
          %s188 = scalar_lea.sflag [#allocation3], %s187
          %s189 = sand.u32 %s41, 1
          %s190 = smul.addr %s189, 8
          %s191 = scalar_lea.vmem [#allocation2], %s190
          %s192 = smul.u32 2, %s25
          %s193 = ssub.s32 3, %s192
          %p194 = scmp.lt.s32.totalorder %s193, 2
          %s195 = scalar_select %p194, %s193, 2
          %s196 = smul.u32 64, %s195
          %s198 = ssub.s32 128, %s196
          %199 = vsyncadd %s188, %s198
          %p200 = scmp.ne.s32.totalorder 0, %s196
          %s201 = smul.addr %s24, 3
          %s202 = sadd.s32 %s192, %s201
          %s203 = smul.addr %s202, 64
          %s204 = scalar_lea.hbm %s0, %s203
          %s205 = smul.u32 %s195, 4
          %s206 = sshll.u32 %s205, 4
          %s207 = sshll.u32 %s191, 4
          %s208 = int_to_ptr.vmem [resolvable:$true] %s207
          %210 = dma.hbm_to_vmem [thread:$0]  (%p200), %s204, %s206, %s208, %s188
        $region20: #{tpu_custom_call.1} parent=15 // pred_fallthru
          _
        // Predicated region
        $region21: #{tpu_custom_call.1} parent=15 // pred_check
          %p211 = pneg %p79
        $region22: #{tpu_custom_call.1} parent=15 // pred_check_branch
          %213 = sbr.rel (%p211) target = $region24
        $region23: #{tpu_custom_call.1} parent=15 // pred_region
          %s214 = sand.u32 %s17, 1
          %s215 = scalar_lea.sflag [#allocation5], %s214
          %s216 = sand.u32 %s69, 1
          %s217 = smul.addr %s216, 8
          %s218 = scalar_lea.vmem [#allocation4], %s217
          %s219 = smul.u32 2, %s25
          %s220 = ssub.s32 3, %s219
          %p221 = scmp.lt.s32.totalorder %s220, 2
          %s222 = scalar_select %p221, %s220, 2
          %s223 = smul.u32 64, %s222
          %s225 = ssub.s32 128, %s223
          %226 = vsyncadd %s215, %s225
          %p227 = scmp.ne.s32.totalorder 0, %s223
          %s228 = smul.addr %s24, 3
          %s229 = sadd.s32 %s219, %s228
          %s230 = smul.addr %s229, 64
          %s231 = scalar_lea.hbm %s1, %s230
          %s232 = smul.u32 %s222, 4
          %s233 = sshll.u32 %s232, 4
          %s234 = sshll.u32 %s218, 4
          %s235 = int_to_ptr.vmem [resolvable:$true] %s234
          %237 = dma.hbm_to_vmem [thread:$0]  (%p227), %s231, %s233, %s235, %s215
        $region24: #{tpu_custom_call.1} parent=15 // pred_fallthru
          _
        // Predicated region
        $region25: #{tpu_custom_call.1} parent=15 // pred_check
          %p238 = pneg %p107
        $region26: #{tpu_custom_call.1} parent=15 // pred_check_branch
          %240 = sbr.rel (%p238) target = $region28
        $region27: #{tpu_custom_call.1} parent=15 // pred_region
          %s241 = sand.u32 %s17, 1
          %s242 = scalar_lea.sflag [#allocation5], %s241
          %s243 = sand.u32 %s97, 1
          %s244 = smul.addr %s243, 8
          %s245 = scalar_lea.vmem [#allocation6], %s244
          %s246 = smul.u32 2, %s25
          %s247 = ssub.s32 3, %s246
          %p248 = scmp.lt.s32.totalorder %s247, 2
          %s249 = scalar_select %p248, %s247, 2
          %s250 = smul.u32 64, %s249
          %s252 = ssub.s32 128, %s250
          %253 = vsyncadd %s242, %s252
          %p254 = scmp.ne.s32.totalorder 0, %s250
          %s255 = smul.addr %s24, 3
          %s256 = sadd.s32 %s246, %s255
          %s257 = smul.addr %s256, 64
          %s258 = scalar_lea.hbm %s2, %s257
          %s259 = smul.u32 %s249, 4
          %s260 = sshll.u32 %s259, 4
          %s261 = sshll.u32 %s245, 4
          %s262 = int_to_ptr.vmem [resolvable:$true] %s261
          %264 = dma.hbm_to_vmem [thread:$0]  (%p254), %s258, %s260, %s262, %s242
        $region28: #{tpu_custom_call.1} parent=15 // pred_fallthru
          _
      $region16: #{tpu_custom_call.1} parent=5 // pred_fallthru
        _
      %p265 = scmp.le.s32.totalorder 1, %s17
      %p266 = scmp.lt.s32.totalorder %s17, 3
      %p267 = pnand %p265, %p266
      %p268 = pneg %p267
      // Predicated region
      $region29: #{tpu_custom_call.1} parent=5 // pred_check
        _
      $region30: #{tpu_custom_call.1} parent=5 // pred_check_branch
        %270 = sbr.rel (%p267) target = $region32
      $region31: #{tpu_custom_call.1} parent=5 // pred_region
        %s271 = ssub.s32 %s17, 1
        %s272 = sand.u32 %s44, 1
        %s273 = scalar_lea.sflag [#allocation3], %s272
        %s274 = sand.u32 %s44, 1
        %s275 = smul.addr %s274, 8
        %s276 = scalar_lea.vmem [#allocation2], %s275
        // Predicated region
        $region33: #{tpu_custom_call.1} parent=31 // pred_check
          %p277 = pneg %p57
        $region34: #{tpu_custom_call.1} parent=31 // pred_check_branch
          %279 = sbr.rel (%p277) target = $region36
        $region35: #{tpu_custom_call.1} parent=31 // pred_region
          %280 = dma.done %s273, 128
        $region36: #{tpu_custom_call.1} parent=31 // pred_fallthru
          _
        %s281 = sand.u32 %s22, 1
        %s282 = scalar_lea.sflag [#allocation5], %s281
        %s283 = sand.u32 %s72, 1
        %s284 = smul.addr %s283, 8
        %s285 = scalar_lea.vmem [#allocation4], %s284
        // Predicated region
        $region37: #{tpu_custom_call.1} parent=31 // pred_check
          %p286 = pneg %p85
        $region38: #{tpu_custom_call.1} parent=31 // pred_check_branch
          %288 = sbr.rel (%p286) target = $region40
        $region39: #{tpu_custom_call.1} parent=31 // pred_region
          %289 = dma.done %s282, 128
        $region40: #{tpu_custom_call.1} parent=31 // pred_fallthru
          _
        %s290 = sand.u32 %s22, 1
        %s291 = scalar_lea.sflag [#allocation5], %s290
        %s292 = sand.u32 %s100, 1
        %s293 = smul.addr %s292, 8
        %s294 = scalar_lea.vmem [#allocation6], %s293
        // Predicated region
        $region41: #{tpu_custom_call.1} parent=31 // pred_check
          %p295 = pneg %p113
        $region42: #{tpu_custom_call.1} parent=31 // pred_check_branch
          %297 = sbr.rel (%p295) target = $region44
        $region43: #{tpu_custom_call.1} parent=31 // pred_region
          %298 = dma.done %s291, 128
        $region44: #{tpu_custom_call.1} parent=31 // pred_fallthru
          _
        %s299 = sand.u32 %s44, 1
        %s300 = scalar_lea.sflag [#allocation3], %s299
        %s301 = sand.u32 %s44, 1
        %s302 = smul.addr %s301, 8
        %s303 = scalar_lea.vmem [#allocation2], %s302
        %p304 = pneg %p57
        %p305 = pneg %p54
        %s306 = sand.u32 %s22, 1
        %s307 = scalar_lea.sflag [#allocation5], %s306
        %s308 = sand.u32 %s72, 1
        %s309 = smul.addr %s308, 8
        %s310 = scalar_lea.vmem [#allocation4], %s309
        %p311 = pneg %p85
        %p312 = pneg %p82
        %s313 = sand.u32 %s22, 1
        %s314 = scalar_lea.sflag [#allocation5], %s313
        %s315 = sand.u32 %s100, 1
        %s316 = smul.addr %s315, 8
        %s317 = scalar_lea.vmem [#allocation6], %s316
        %p318 = pneg %p113
        %p319 = pneg %p110
        %p320 = pneg %p139
        %p321 = pneg %p136
        %p322 = scmp.lt.s32.totalorder %s26, 0
        %s323 = scalar_select %p322, %s26, 0
        %s324 = smul.addr %s323, 4
        %s325 = scalar_lea.vmem %s3, %s324
        %p326 = pneg %p165
        %p327 = pneg %p162
        %p328 = scmp.lt.s32.totalorder %s26, 0
        %s329 = scalar_select %p328, %s26, 0
        %s330 = smul.addr %s329, 4
        %s331 = scalar_lea.vmem %s4, %s330
        %s332 = smul.u32 2, %s27
        %s333 = ssub.s32 3, %s332
        %p334 = scmp.lt.s32.totalorder %s333, 2
        %s335 = scalar_select %p334, %s333, 2
        %s336 = smul.u32 64, %s335
        %s337 = smul.u32 2, %s27
        %s338 = ssub.s32 3, %s337
        %p339 = scmp.lt.s32.totalorder %s338, 2
        %s340 = scalar_select %p339, %s338, 2
        %s341 = smul.u32 64, %s340
        %s342 = smul.u32 2, %s27
        %s343 = ssub.s32 3, %s342
        %p344 = scmp.lt.s32.totalorder %s343, 2
        %s345 = scalar_select %p344, %s343, 2
        %s346 = smul.u32 64, %s345
        %p347 = scmp.lt.s32.totalorder %s26, 0
        %s348 = scalar_select %p347, %s26, 0
        %s349 = smul.addr %s348, 4
        %s350 = scalar_lea.vmem %s3, %s349
        %p351 = scmp.lt.s32.totalorder %s26, 0
        %s352 = scalar_select %p351, %s26, 0
        %s353 = smul.addr %s352, 4
        %s354 = scalar_lea.vmem %s4, %s353
        %p355 = scmp.eq.s32.totalorder %s27, 0
        // Predicated region
        $region45: #{tpu_custom_call.1} parent=31 // pred_check
          %p356 = pneg %p355
        $region46: #{tpu_custom_call.1} parent=31 // pred_check_branch
          %358 = sbr.rel (%p356) target = $region48
        $region47: #{tpu_custom_call.1} parent=31 // pred_region
          %vm359 = vcmask 3072
          %360 = vst.msk [vmem:[%s350] sm:$0xf] %vm359, 0.0
          %361 = vst.msk [vmem:[%s354] sm:$0xf] %vm359, 0.0
        $region48: #{tpu_custom_call.1} parent=31 // pred_fallthru
          _
        %v362 = vld [vmem:[%s276] sm:$0xff]
        %v363 = vld [vmem:[%s285] sm:$0xff]
        %v364 = vsub.f32 %v362, %v363
        %v365 = vld [vmem:[%s294] sm:$0xff]
        %v366 = vmul.f32 %v364, %v364
        %v367 = vmul.f32 %v366, %v365
        %v368 = vlaneseq
        %v369 = vand.u32 %v368, 127
        %v370 = vadd.s32 %v369, 128
        %s371 = smul.u32 %s27, 256
        %v372 = vstv %s371
        %v373 = vadd.s32 %v372, %v369
        %v374 = vadd.s32 %v372, %v370
        %vm375 = vcmp.lt.s32.totalorder %v373, 300
        %vm376 = vcmp.lt.s32.totalorder %v374, 300
        %v377 = vsel %vm375, 1, 0
        %v378 = vsel %vm376, 1, 0
        %vm379 = vcmp.eq.s32.totalorder %v377, 1
        %vm380 = vcmp.eq.s32.totalorder %v378, 1
        %v382 = vcombine.high %v367, %v367
        %v384 = vsel %vm379, %v367, 0.0
        %v385 = vsel %vm380, %v382, 0.0
        %v386 = vld [vmem:[%s350] sm:$0xf]
        %vm387 = vcmask 1043456
        %v388 = vsel %vm387, %v384, 0.0
        %v389 = vsel %vm387, %v385, 0.0
        %v390 = vadd.f32 %v388, %v389
        %391 = vadd.xlane.f32.xlu0 %v390
        %v392 = vpop.xlane.xlu0 %391
        %v393 = vadd.f32 %v386, %v392
        %vm394 = vcmask 3072
        %395 = vst.msk [vmem:[%s350] sm:$0xf] %vm394, %v393
        %v397 = vcombine.high %v365, %v365
        %v399 = vsel %vm379, %v365, 0.0
        %v400 = vsel %vm380, %v397, 0.0
        %v401 = vld [vmem:[%s354] sm:$0xf]
        %v402 = vsel %vm387, %v399, 0.0
        %v403 = vsel %vm387, %v400, 0.0
        %v404 = vadd.f32 %v402, %v403
        %405 = vadd.xlane.f32.xlu0 %v404
        %v406 = vpop.xlane.xlu0 %405
        %v407 = vadd.f32 %v401, %v406
        %408 = vst.msk [vmem:[%s354] sm:$0xf] %vm394, %v407
        %p409 = scmp.lt.s32.totalorder %s26, 0
        %s410 = scalar_select %p409, %s26, 0
        %s411 = smul.addr %s410, 4
        %s412 = scalar_lea.vmem %s3, %s411
        %p413 = scmp.lt.s32.totalorder %s26, 0
        %s414 = scalar_select %p413, %s26, 0
        %s415 = smul.addr %s414, 4
        %s416 = scalar_lea.vmem %s4, %s415
        // Predicated region
        $region49: #{tpu_custom_call.1} parent=31 // pred_check
          %p417 = pneg %p136
        $region50: #{tpu_custom_call.1} parent=31 // pred_check_branch
          %419 = sbr.rel (%p417) target = $region52
        $region51: #{tpu_custom_call.1} parent=31 // pred_region
          _
        $region52: #{tpu_custom_call.1} parent=31 // pred_fallthru
          _
        // Predicated region
        $region53: #{tpu_custom_call.1} parent=31 // pred_check
          %p420 = pneg %p162
        $region54: #{tpu_custom_call.1} parent=31 // pred_check_branch
          %422 = sbr.rel (%p420) target = $region56
        $region55: #{tpu_custom_call.1} parent=31 // pred_region
          _
        $region56: #{tpu_custom_call.1} parent=31 // pred_fallthru
          _
        // Predicated region
        $region57: #{tpu_custom_call.1} parent=31 // pred_check
          %p423 = pneg %p136
        $region58: #{tpu_custom_call.1} parent=31 // pred_check_branch
          %425 = sbr.rel (%p423) target = $region60
        $region59: #{tpu_custom_call.1} parent=31 // pred_region
          %p426 = scmp.lt.s32.totalorder %s26, 0
          %s427 = scalar_select %p426, %s26, 0
          %s428 = smul.addr %s427, 4
          %s429 = scalar_lea.vmem %s3, %s428
        $region60: #{tpu_custom_call.1} parent=31 // pred_fallthru
          _
        // Predicated region
        $region61: #{tpu_custom_call.1} parent=31 // pred_check
          %p430 = pneg %p162
        $region62: #{tpu_custom_call.1} parent=31 // pred_check_branch
          %432 = sbr.rel (%p430) target = $region64
        $region63: #{tpu_custom_call.1} parent=31 // pred_region
          %p433 = scmp.lt.s32.totalorder %s26, 0
          %s434 = scalar_select %p433, %s26, 0
          %s435 = smul.addr %s434, 4
          %s436 = scalar_lea.vmem %s4, %s435
        $region64: #{tpu_custom_call.1} parent=31 // pred_fallthru
          _
      $region32: #{tpu_custom_call.1} parent=5 // pred_fallthru
        _
      %p437 = scmp.le.s32.totalorder 2, %s17
      // Predicated region
      $region65: #{tpu_custom_call.1} parent=5 // pred_check
        %p438 = pneg %p437
      $region66: #{tpu_custom_call.1} parent=5 // pred_check_branch
        %440 = sbr.rel (%p438) target = $region68
      $region67: #{tpu_custom_call.1} parent=5 // pred_region
        %s441 = ssub.s32 %s17, 2
      $region68: #{tpu_custom_call.1} parent=5 // pred_fallthru
        _
    $region6: #{tpu_custom_call.1} parent=1 // loop_footer
      %s21 = sadd.s32 1, %s17
    $region7: #{tpu_custom_call.1} parent=1 // loop_footer_branch
      %16 = sbr.rel target = $region3
    $region8: #{tpu_custom_call.1} parent=1 // loop_exit
      _
    %442 = vsyncpa [#allocation3], 1
    %s443 = scalar_lea.sflag [#allocation3], 1
    %444 = vsyncpa %s443, 1
    %445 = vsyncpa [#allocation5], 1
    %s446 = scalar_lea.sflag [#allocation5], 1
    %447 = vsyncpa %s446, 1

</llo_original>
